<compile_context>
chip_gen: v7x
topology: tpu7x:2x2x1
jax: 0.10.0
libtpu: 0.0.40
codegen_flags: <defaults>
</compile_context>

<pallas_src>
import functools

import jax
import jax.numpy as jnp
from jax.experimental import pallas as pl
from jax.experimental.pallas import tpu as pltpu

_LANE = 128
_MIB = 1024 * 1024


# ----------------------------------------------------------------------------
# Kernel
# ----------------------------------------------------------------------------
def _attention_kernel(g_ref, x_ref, wg_ref, wx_ref, b_ref, wp_ref, bp_ref,
                      o_ref, *, mul_in_f32):
    x = x_ref[...]                                        # (tm, F_l), act dtype
    # W_g(g) and W_x(x_skip): 1x1 convs (+ folded BN) == matmuls, f32 accum.
    g1 = jnp.dot(g_ref[...], wg_ref[...], preferred_element_type=jnp.float32)
    x1 = jnp.dot(x, wx_ref[...], preferred_element_type=jnp.float32)
    # Combined bias (bg + bx) and ReLU.
    a = jnp.maximum(g1 + x1 + b_ref[...], 0.0)            # (tm, F_ip), f32
    # psi: F_int -> 1 projection on VPU/XLU (mul + lane reduce), not a
    # degenerate width-1 MXU matmul.
    psi_logit = jnp.sum(a * wp_ref[...], axis=-1, keepdims=True) + bp_ref[...]
    psi = jax.nn.sigmoid(psi_logit)                       # (tm, 1), f32
    # x_skip * psi (broadcast over channels).
    if mul_in_f32:
        out = x.astype(jnp.float32) * psi
    else:
        out = x * psi.astype(x.dtype)                     # bf16 VPU epilogue
    o_ref[...] = out.astype(o_ref.dtype)


def _const_spec(shape, index_map):
    """BlockSpec for grid-invariant (weight/bias) blocks: single-buffered."""
    try:
        return pl.BlockSpec(shape, index_map, pipeline_mode=pl.Buffered(1))
    except Exception:  # older BlockSpec without pipeline_mode kwarg
        return pl.BlockSpec(shape, index_map)


def _attention_block_pallas(g_flat, x_flat, wg, wx, b, wp, bp, *,
                            tm, out_dtype, mul_in_f32, vmem_limit_bytes):
    rows, F_g = g_flat.shape
    _, F_l = x_flat.shape
    F_ip = wg.shape[1]
    assert rows % tm == 0, "rows must be padded to a multiple of the row tile"

    kernel = functools.partial(_attention_kernel, mul_in_f32=mul_in_f32)
    full = lambda i: (0, 0)

    return pl.pallas_call(
        kernel,
        out_shape=jax.ShapeDtypeStruct((rows, F_l), out_dtype),
        grid_spec=pltpu.PrefetchScalarGridSpec(
            num_scalar_prefetch=0,
            grid=(rows // tm,),
            in_specs=[
                pl.BlockSpec((tm, F_g), lambda i: (i, 0)),   # g tile
                pl.BlockSpec((tm, F_l), lambda i: (i, 0)),   # x_skip tile
                _const_spec((F_g, F_ip), full),              # W_g (folded BN)
                _const_spec((F_l, F_ip), full),              # W_x (folded BN)
                _const_spec((1, F_ip), full),                # bg + bx (folded)
                _const_spec((1, F_ip), full),                # W_psi row
                _const_spec((1, 1), full),                   # b_psi
            ],
            out_specs=pl.BlockSpec((tm, F_l), lambda i: (i, 0)),
        ),
        compiler_params=pltpu.CompilerParams(
            dimension_semantics=("parallel",),
            vmem_limit_bytes=int(vmem_limit_bytes)),
    )(g_flat, x_flat, wg, wx, b, wp, bp)


# ----------------------------------------------------------------------------
# Tiling / padding helpers
# ----------------------------------------------------------------------------
def _round_up(x, m):
    return ((x + m - 1) // m) * m


def _pad_rows(a, rows_p):
    r = a.shape[0]
    return a if r == rows_p else jnp.pad(a, ((0, rows_p - r), (0, 0)))


def _pad_cols(a, cols_p):
    c = a.shape[1]
    return a if c == cols_p else jnp.pad(a, ((0, 0), (0, cols_p - c)))


def _tpu_vmem_capacity():
    try:
        return int(pltpu.get_tpu_info().vmem_capacity_bytes)
    except Exception:
        return 64 * _MIB            # conservative: v7x per-TensorCore VMEM


def _has_bf16_vpu():
    """v6e/v7x have bf16 VALUs; older generations do not."""
    try:
        kind = jax.devices()[0].device_kind.lower()
    except Exception:
        return False
    return not any(v in kind for v in ("v2", "v3", "v4", "v5"))


def _pick_row_tile(rows_p, *, F_g, F_l, F_ip, act_bytes, out_bytes,
                   mul_in_f32, budget, tm_cap):
    """Largest row tile (multiple of 128, divisor of rows_p) that fits VMEM,
    preferring >= 4 grid steps for cross-core sharding + DMA/compute overlap."""
    F_g_v, F_l_v = _round_up(F_g, _LANE), _round_up(F_l, _LANE)   # VMEM lane pad
    sub = 16 if act_bytes == 2 else 8
    # Weights counted double-buffered (conservative; Buffered(1) usually halves).
    w_bytes = 2 * ((_round_up(F_g, sub) + _round_up(F_l, sub)) * F_ip * act_bytes
                   + 2 * F_ip * 4 + 8 * _LANE * 4)

    def est(t):
        act = 2 * t * (F_g_v + F_l_v) * act_bytes          # g, x double-buffered
        out = 2 * t * F_l_v * out_bytes                     # output double-buffered
        scratch = 3 * t * F_ip * 4 + t * _LANE * 4          # g1, x1, a, psi column
        if mul_in_f32:
            scratch += t * F_l_v * 4                        # f32 cast of x tile
        return act + out + w_bytes + scratch

    cands = [t for t in range(_LANE, min(tm_cap, rows_p) + 1, _LANE)
             if rows_p % t == 0]
    fits = [t for t in cands if est(t) <= budget] or [_LANE]
    # TODO(synk): if even est(128) exceeds the budget (very wide channels on
    # v7x) a channel/F_int tiling fallback would be needed; we fall back to the
    # smallest row tile and the raised vmem_limit instead.
    for min_steps in (4, 2, 1):
        ok = [t for t in fits if rows_p // t >= min_steps]
        if ok:
            return max(ok)
    return fits[0]


# ----------------------------------------------------------------------------
# BatchNorm folding + wrappers
# ----------------------------------------------------------------------------
def fold_bn(weight, bias, gamma, beta, mean, var, eps=1e-5):
    """Fold eval-mode BatchNorm into a preceding 1x1 conv.
    weight: (Cout, Cin) PyTorch layout of a 1x1 conv squeezed.
    Returns (W', b') with W' transposed to (Cin, Cout) for activation @ W'."""
    scale = gamma / jnp.sqrt(var + eps)                  # (Cout,)
    w_folded = weight * scale[:, None]                   # (Cout, Cin)
    b_folded = (bias - mean) * scale + beta              # (Cout,)
    return w_folded.T, b_folded[None, :]                 # (Cin, Cout), (1, Cout)


def attention_block_nhwc(g_nhwc, x_nhwc, params, *, act_dtype=jnp.bfloat16,
                         tm=None):
    """Preferred entry point: NHWC activations, no transposes needed."""
    (wg, bg, bn_g), (wx, bx, bn_x), (wp, bp, bn_p) = params
    N, H, W, F_g = g_nhwc.shape
    F_l = x_nhwc.shape[-1]
    out_dtype = x_nhwc.dtype
    act_dtype = jnp.dtype(act_dtype)

    # Fold eval-mode BN into the 1x1 convs (exact eval semantics).
    wg_f, bg_f = fold_bn(wg, bg, *bn_g)          # (F_g, F_int), (1, F_int)
    wx_f, bx_f = fold_bn(wx, bx, *bn_x)          # (F_l, F_int), (1, F_int)
    wp_f, bp_f = fold_bn(wp, bp, *bn_p)          # (F_int, 1),  (1, 1)
    F_int = wg_f.shape[1]
    # Only the (tiny, HBM-cheap) F_int weight axis is lane-padded; activation
    # channel axes stay unpadded so HBM reads/writes move only real bytes.
    F_ip = _round_up(F_int, _LANE)

    wg_p = _pad_cols(wg_f, F_ip).astype(act_dtype)           # (F_g, F_ip)
    wx_p = _pad_cols(wx_f, F_ip).astype(act_dtype)           # (F_l, F_ip)
    b_p = _pad_cols((bg_f + bx_f).astype(jnp.float32), F_ip)  # (1, F_ip)
    wp_p = _pad_cols(wp_f.T.astype(jnp.float32), F_ip)        # (1, F_ip)
    bp_p = bp_f.astype(jnp.float32)                           # (1, 1)

    rows = N * H * W
    rows_p = _round_up(rows, _LANE)

    act_bytes = act_dtype.itemsize
    out_bytes = jnp.dtype(out_dtype).itemsize
    vmem_cap = _tpu_vmem_capacity()
    vmem_limit = max(32 * _MIB, int(vmem_cap * 0.75))
    tm_cap = 512 if vmem_cap <= 64 * _MIB else 1024           # v7x: 64 MiB VMEM
    if tm is not None:
        tm_cap = min(tm_cap, max(_LANE, _round_up(int(tm), _LANE)))
    mul_in_f32 = (act_dtype == jnp.float32) or (not _has_bf16_vpu())

    tm_sel = _pick_row_tile(rows_p, F_g=F_g, F_l=F_l, F_ip=F_ip,
                            act_bytes=act_bytes, out_bytes=out_bytes,
                            mul_in_f32=mul_in_f32,
                            budget=vmem_limit - 4 * _MIB, tm_cap=tm_cap)

    g_flat = _pad_rows(g_nhwc.reshape(rows, F_g).astype(act_dtype), rows_p)
    x_flat = _pad_rows(x_nhwc.reshape(rows, F_l).astype(act_dtype), rows_p)

    out_flat = _attention_block_pallas(
        g_flat, x_flat, wg_p, wx_p, b_p, wp_p, bp_p,
        tm=tm_sel, out_dtype=out_dtype, mul_in_f32=mul_in_f32,
        vmem_limit_bytes=vmem_limit)

    return out_flat[:rows].reshape(N, H, W, F_l)


def attention_block(g_nchw, x_nchw, params, *, act_dtype=jnp.bfloat16, tm=None):
    """PyTorch-compatible NCHW entry point.
    NOTE: if the surrounding network keeps activations NHWC, call
    attention_block_nhwc directly and skip these two HBM transpose round trips."""
    g_nhwc = jnp.transpose(g_nchw, (0, 2, 3, 1))
    x_nhwc = jnp.transpose(x_nchw, (0, 2, 3, 1))
    out = attention_block_nhwc(g_nhwc, x_nhwc, params, act_dtype=act_dtype,
                               tm=tm)
    return jnp.transpose(out, (0, 3, 1, 2))


# ----------------------------------------------------------------------------
# Params + plain-JAX reference
# ----------------------------------------------------------------------------
def make_params(key, F_g, F_l, F_int, dtype=jnp.float32):
    ks = jax.random.split(key, 9)

    def bn(kb, c):
        k1, k2, k3 = jax.random.split(kb, 3)
        gamma = 1.0 + 0.1 * jax.random.normal(k1, (c,), dtype)
        beta = 0.1 * jax.random.normal(k2, (c,), dtype)
        mean = 0.05 * jax.random.normal(k3, (c,), dtype)
        var = jnp.ones((c,), dtype)
        return gamma, beta, mean, var

    wg = 0.1 * jax.random.normal(ks[0], (F_int, F_g), dtype)
    bg = 0.1 * jax.random.normal(ks[1], (F_int,), dtype)
    wx = 0.1 * jax.random.normal(ks[2], (F_int, F_l), dtype)
    bx = 0.1 * jax.random.normal(ks[3], (F_int,), dtype)
    wp = 0.1 * jax.random.normal(ks[4], (1, F_int), dtype)
    bp = 0.1 * jax.random.normal(ks[5], (1,), dtype)
    return (wg, bg, bn(ks[6], F_int)), (wx, bx, bn(ks[7], F_int)), \
           (wp, bp, bn(ks[8], 1))


def attention_block_ref(g_nchw, x_nchw, params):
    """Plain-JAX reference (eval-mode BN) for verification."""
    (wg, bg, bn_g), (wx, bx, bn_x), (wp, bp, bn_p) = params

    def conv_bn(x, w, b, bn):
        gamma, beta, mean, var = bn
        y = jnp.einsum('nchw,oc->nohw', x, w) + b[None, :, None, None]
        scale = gamma / jnp.sqrt(var + 1e-5)
        return (y - mean[None, :, None, None]) * scale[None, :, None, None] \
               + beta[None, :, None, None]

    g1 = conv_bn(g_nchw, wg, bg, bn_g)
    x1 = conv_bn(x_nchw, wx, bx, bn_x)
    a = jnp.maximum(g1 + x1, 0.0)
    psi = jax.nn.sigmoid(conv_bn(a, wp, bp, bn_p))
    return x_nchw * psi


# ----------------------------------------------------------------------------
# Self-test
# ----------------------------------------------------------------------------
if __name__ == "__main__":
    key = jax.random.PRNGKey(0)
    k_g, k_x, k_p, k_g2, k_x2, k_p2 = jax.random.split(key, 6)

    # Case 1: rows = 2*16*16 = 512 (multiple of 128), tiny channels.
    N, F_g, F_l, F_int, H, W = 2, 4, 4, 8, 16, 16
    g = jax.random.normal(k_g, (N, F_g, H, W), jnp.float32)
    x_skip = jax.random.normal(k_x, (N, F_l, H, W), jnp.float32)
    params = make_params(k_p, F_g, F_l, F_int)
    ref = attention_block_ref(g, x_skip, params)

    # f32 path: matches the reference tightly.
    out_f32 = jax.block_until_ready(
        attention_block(g, x_skip, params, act_dtype=jnp.float32))
    assert out_f32.shape == (N, F_l, H, W)
    assert jnp.allclose(out_f32, ref, atol=1e-4, rtol=1e-4), "f32 mismatch"

    # Default (bf16 I/O) path: halves HBM traffic; f32 accumulation keeps it
    # close to the reference, looser tolerance for bf16 quantization.
    out_bf16 = jax.block_until_ready(attention_block(g, x_skip, params))
    assert out_bf16.shape == (N, F_l, H, W)
    assert jnp.allclose(out_bf16.astype(jnp.float32), ref,
                        atol=5e-2, rtol=5e-2), "bf16 mismatch"

    # Case 2: odd spatial/channel sizes (rows=169 -> padded to 256; unpadded
    # channel axes exercise the full-dim block path).
    N2, F_g2, F_l2, F_int2, H2, W2 = 1, 12, 20, 16, 13, 13
    g2 = jax.random.normal(k_g2, (N2, F_g2, H2, W2), jnp.float32)
    x2 = jax.random.normal(k_x2, (N2, F_l2, H2, W2), jnp.float32)
    params2 = make_params(k_p2, F_g2, F_l2, F_int2)
    ref2 = attention_block_ref(g2, x2, params2)
    out2 = jax.block_until_ready(
        attention_block(g2, x2, params2, act_dtype=jnp.float32))
    assert out2.shape == (N2, F_l2, H2, W2)
    assert jnp.allclose(out2, ref2, atol=1e-4, rtol=1e-4), "odd-shape mismatch"

    print("KERNEL_OK")
</pallas_src>

<mosaic_0001>
module attributes {stable_mosaic.version = 11 : i64} {
  func.func @_attention_kernel(%arg0: i32, %arg1: memref<128x4xf32, #tpu.memory_space<vmem>>, %arg2: memref<128x4xf32, #tpu.memory_space<vmem>>, %arg3: memref<4x128xf32, #tpu.memory_space<vmem>>, %arg4: memref<4x128xf32, #tpu.memory_space<vmem>>, %arg5: memref<1x128xf32, #tpu.memory_space<vmem>>, %arg6: memref<1x128xf32, #tpu.memory_space<vmem>>, %arg7: memref<1x1xf32, #tpu.memory_space<vmem>>, %arg8: memref<128x4xf32, #tpu.memory_space<vmem>>) attributes {dimension_semantics = [#tpu.dimension_semantics<parallel>], iteration_bounds = array<i64: 4>, scalar_prefetch = 0 : i64, scratch_operands = 0 : i64, tpu.core_type = #tpu.core_type<tc>, window_params = [{transform_indices = @transform_0, window_bounds = array<i64: 128, 4>}, {transform_indices = @transform_1, window_bounds = array<i64: 128, 4>}, {pipeline_mode = #tpu.pipeline_mode<synchronous>, transform_indices = @transform_2, window_bounds = array<i64: 4, 128>}, {pipeline_mode = #tpu.pipeline_mode<synchronous>, transform_indices = @transform_3, window_bounds = array<i64: 4, 128>}, {pipeline_mode = #tpu.pipeline_mode<synchronous>, transform_indices = @transform_4, window_bounds = array<i64: 1, 128>}, {pipeline_mode = #tpu.pipeline_mode<synchronous>, transform_indices = @transform_5, window_bounds = array<i64: 1, 128>}, {pipeline_mode = #tpu.pipeline_mode<synchronous>, transform_indices = @transform_6, window_bounds = array<i64: 1, 1>}, {transform_indices = @transform_7, window_bounds = array<i64: 128, 4>}]} {
    %c0 = arith.constant 0 : index
    %c0_0 = arith.constant 0 : index
    %0 = vector.load %arg2[%c0, %c0_0] : memref<128x4xf32, #tpu.memory_space<vmem>>, vector<128x4xf32>
    %c0_1 = arith.constant 0 : index
    %c0_2 = arith.constant 0 : index
    %1 = vector.load %arg1[%c0_1, %c0_2] : memref<128x4xf32, #tpu.memory_space<vmem>>, vector<128x4xf32>
    %c0_3 = arith.constant 0 : index
    %c0_4 = arith.constant 0 : index
    %2 = vector.load %arg3[%c0_3, %c0_4] : memref<4x128xf32, #tpu.memory_space<vmem>>, vector<4x128xf32>
    %cst = arith.constant dense<0.000000e+00> : vector<128x128xf32>
    %3 = tpu.matmul %1, %2, %cst {dimension_numbers = #tpu.dot_dimension_numbers<[1], [0], [0], [1], [0, 0, 1, 1], [], []>} : vector<128x4xf32>, vector<4x128xf32>, vector<128x128xf32> -> vector<128x128xf32>
    %c0_5 = arith.constant 0 : index
    %c0_6 = arith.constant 0 : index
    %4 = vector.load %arg4[%c0_5, %c0_6] : memref<4x128xf32, #tpu.memory_space<vmem>>, vector<4x128xf32>
    %cst_7 = arith.constant dense<0.000000e+00> : vector<128x128xf32>
    %5 = tpu.matmul %0, %4, %cst_7 {dimension_numbers = #tpu.dot_dimension_numbers<[1], [0], [0], [1], [0, 0, 1, 1], [], []>} : vector<128x4xf32>, vector<4x128xf32>, vector<128x128xf32> -> vector<128x128xf32>
    %6 = arith.addf %3, %5 : vector<128x128xf32>
    %c0_8 = arith.constant 0 : index
    %c0_9 = arith.constant 0 : index
    %7 = vector.load %arg5[%c0_8, %c0_9] : memref<1x128xf32, #tpu.memory_space<vmem>>, vector<1x128xf32>
    %8 = vector.broadcast %7 : vector<1x128xf32> to vector<128x128xf32>
    %9 = arith.addf %6, %8 : vector<128x128xf32>
    %cst_10 = arith.constant 0.000000e+00 : f32
    %10 = vector.broadcast %cst_10 : f32 to vector<128x128xf32>
    %11 = arith.maximumf %9, %10 : vector<128x128xf32>
    %c0_11 = arith.constant 0 : index
    %c0_12 = arith.constant 0 : index
    %12 = vector.load %arg6[%c0_11, %c0_12] : memref<1x128xf32, #tpu.memory_space<vmem>>, vector<1x128xf32>
    %13 = vector.broadcast %12 : vector<1x128xf32> to vector<128x128xf32>
    %14 = arith.mulf %11, %13 : vector<128x128xf32>
    %cst_13 = arith.constant dense<0.000000e+00> : vector<128xf32>
    %15 = vector.multi_reduction <add>, %14, %cst_13 [1] : vector<128x128xf32> to vector<128xf32>
    %16 = vector.shape_cast %15 : vector<128xf32> to vector<128x1xf32>
    %c0_14 = arith.constant 0 : index
    %c0_15 = arith.constant 0 : index
    %17 = vector.load %arg7[%c0_14, %c0_15] : memref<1x1xf32, #tpu.memory_space<vmem>>, vector<1x1xf32>
    %18 = vector.broadcast %17 : vector<1x1xf32> to vector<128x1xf32>
    %19 = arith.addf %16, %18 : vector<128x1xf32>
    %20 = arith.negf %19 : vector<128x1xf32>
    %21 = math.exp %20 : vector<128x1xf32>
    %cst_16 = arith.constant 1.000000e+00 : f32
    %22 = vector.broadcast %cst_16 : f32 to vector<128x1xf32>
    %23 = arith.addf %22, %21 : vector<128x1xf32>
    %24 = arith.divf %22, %23 : vector<128x1xf32>
    %25 = vector.broadcast %24 : vector<128x1xf32> to vector<128x4xf32>
    %26 = arith.mulf %0, %25 : vector<128x4xf32>
    %c0_17 = arith.constant 0 : index
    %c0_18 = arith.constant 0 : index
    %27 = vector.load %arg8[%c0_17, %c0_18] : memref<128x4xf32, #tpu.memory_space<vmem>>, vector<128x4xf32>
    tpu.vector_store %arg8[%c0_17, %c0_18], %26 {strides = array<i32>} : memref<128x4xf32, #tpu.memory_space<vmem>>, vector<128x4xf32>,
    return
  }
  func.func @transform_0(%arg0: i32) -> (i32, i32) {
    %c0_i32 = arith.constant 0 : i32
    %c0_i32_0 = arith.constant 0 : i32
    return %arg0, %c0_i32 : i32, i32
  }
  func.func @transform_1(%arg0: i32) -> (i32, i32) {
    %c0_i32 = arith.constant 0 : i32
    %c0_i32_0 = arith.constant 0 : i32
    return %arg0, %c0_i32 : i32, i32
  }
  func.func @transform_2(%arg0: i32) -> (i32, i32) {
    %c0_i32 = arith.constant 0 : i32
    %c0_i32_0 = arith.constant 0 : i32
    %c0_i32_1 = arith.constant 0 : i32
    return %c0_i32, %c0_i32_0 : i32, i32
  }
  func.func @transform_3(%arg0: i32) -> (i32, i32) {
    %c0_i32 = arith.constant 0 : i32
    %c0_i32_0 = arith.constant 0 : i32
    %c0_i32_1 = arith.constant 0 : i32
    return %c0_i32, %c0_i32_0 : i32, i32
  }
  func.func @transform_4(%arg0: i32) -> (i32, i32) {
    %c0_i32 = arith.constant 0 : i32
    %c0_i32_0 = arith.constant 0 : i32
    %c0_i32_1 = arith.constant 0 : i32
    return %c0_i32, %c0_i32_0 : i32, i32
  }
  func.func @transform_5(%arg0: i32) -> (i32, i32) {
    %c0_i32 = arith.constant 0 : i32
    %c0_i32_0 = arith.constant 0 : i32
    %c0_i32_1 = arith.constant 0 : i32
    return %c0_i32, %c0_i32_0 : i32, i32
  }
  func.func @transform_6(%arg0: i32) -> (i32, i32) {
    %c0_i32 = arith.constant 0 : i32
    %c0_i32_0 = arith.constant 0 : i32
    %c0_i32_1 = arith.constant 0 : i32
    return %c0_i32, %c0_i32_0 : i32, i32
  }
  func.func @transform_7(%arg0: i32) -> (i32, i32) {
    %c0_i32 = arith.constant 0 : i32
    %c0_i32_0 = arith.constant 0 : i32
    return %arg0, %c0_i32 : i32, i32
  }
}

</mosaic_0001>

<llo_original>
// kernel: tpu_custom_call.1
$region0: #{tpu_custom_call.1}
  #allocation0 [shape = 'u32[]', space=smem, size = 0x4, offset = 0x4, fixed_abs, tag = 'smem constant byte address 0x4 - core index']
  #allocation1 [shape = 'u32[144,128]{1,0:T(1,128)}', space=vmem, size = 0x12000, scoped, tag = 'internal scratch']
  #allocation2 [shape = 'f32[1,1]{1,0:T(1,128)S(1)}', space=vmem, size = 0x200, scoped, tag = 'scoped memory for tpu_custom_call.1']
  %s0 = inlined_call_operand.vmem [shape: f32[512,4], index: 0, kind: input, shape index: {}]
  %s1 = inlined_call_operand.vmem [shape: f32[512,4], index: 1, kind: input, shape index: {}]
  %s2 = inlined_call_operand.vmem [shape: f32[4,128], index: 2, kind: input, shape index: {}]
  %s3 = inlined_call_operand.vmem [shape: f32[4,128], index: 3, kind: input, shape index: {}]
  %s4 = inlined_call_operand.vmem [shape: f32[1,128], index: 4, kind: input, shape index: {}]
  %s5 = inlined_call_operand.vmem [shape: f32[1,128], index: 5, kind: input, shape index: {}]
  %s6 = inlined_call_operand.<no memory space> [shape: f32[1,1], index: 6, kind: input, shape index: {}]
  %s7 = inlined_call_operand.vmem [shape: f32[512,4], index: 7, kind: output, shape index: {}]
  %s8 = sld [smem:[#allocation0]]
  $region61: #{tpu_custom_call.1} parent=0
    _
  %s10 = ssub.s32 1, %s8
  %s11 = scalar_select 0, %s10, %s8
  %v12 = vstv %s6
  %13 = vst [vmem:[#allocation2] sm:$0x1] %v12
  loop: start=0, step=1, limit=6
  $region2: #{tpu_custom_call.1} parent=0 // loop_pre_header
    _
  $region3: #{tpu_custom_call.1} parent=0 // loop_header
    %s15 = sphi 0, %s19
    %p16 = scmp.ge.s32.totalorder %s15, 6
    %s25 = sphi 0, %s27
    %s28 = sphi 0, %s25
    %s29 = sphi 0, %s28
    %s45 = sphi 0, %s29
    %s51 = sphi 0, %s53
    %s54 = sphi 0, %s51
    %s55 = sphi 0, %s54
    %s71 = sphi 0, %s55
    %s75 = sphi 0, %s75
    %s77 = sphi 0, %s75
    %s78 = sphi 0, %s77
    %s92 = sphi 0, %s78
    %s96 = sphi 0, %s96
    %s98 = sphi 0, %s96
    %s99 = sphi 0, %s98
    %s113 = sphi 0, %s99
    %s117 = sphi 0, %s117
    %s119 = sphi 0, %s117
    %s120 = sphi 0, %s119
    %s134 = sphi 0, %s120
    %s138 = sphi 0, %s138
    %s140 = sphi 0, %s138
    %s141 = sphi 0, %s140
    %s155 = sphi 0, %s141
    %s159 = sphi 0, %s159
    %s161 = sphi 0, %s159
    %s162 = sphi 0, %s161
    %s176 = sphi 0, %s162
    %s182 = sphi 0, %s184
    %s185 = sphi 0, %s182
    %s186 = sphi 0, %s185
    %s202 = sphi 0, %s186
  $region4: #{tpu_custom_call.1} parent=0 // loop_header_branch
    %18 = sbr.rel (%p16) target = $region8
  $region5: #{tpu_custom_call.1} parent=0 // loop_body
    %s20 = ssub.s32 %s15, 1
    %s21 = ssub.s32 %s15, 2
    %s22 = sadd.s32 %s15, 1
    %s23 = ssub.s32 %s15, %s22
    %p24 = scmp.eq.s32.totalorder %s23, 0
    %s26 = sadd.s32 %s25, 1
    %s27 = scalar_select %p24, %s25, %s26
    %p30 = pneg %p24
    %p31 = scmp.eq.s32.totalorder %s15, 3
    %p32 = por %p30, %p31
    %p33 = scmp.ne.s32.totalorder %s25, %s28
    %p34 = scmp.eq.s32.totalorder %s15, 0
    %p35 = por %p33, %p34
    %p36 = scmp.ne.s32.totalorder %s25, %s28
    %p37 = scmp.eq.s32.totalorder %s20, 3
    %p38 = por %p36, %p37
    %p39 = scmp.ne.s32.totalorder %s28, %s29
    %p40 = scmp.eq.s32.totalorder %s20, 0
    %p41 = por %p39, %p40
    %p42 = scmp.ne.s32.totalorder %s28, %s29
    %p43 = scmp.eq.s32.totalorder %s21, 3
    %p44 = por %p42, %p43
    %p46 = scmp.ne.s32.totalorder %s29, %s45
    %p47 = scmp.eq.s32.totalorder %s21, 0
    %p48 = por %p46, %p47
    %s49 = ssub.s32 %s15, %s22
    %p50 = scmp.eq.s32.totalorder %s49, 0
    %s52 = sadd.s32 %s51, 1
    %s53 = scalar_select %p50, %s51, %s52
    %p56 = pneg %p50
    %p57 = scmp.eq.s32.totalorder %s15, 3
    %p58 = por %p56, %p57
    %p59 = scmp.ne.s32.totalorder %s51, %s54
    %p60 = scmp.eq.s32.totalorder %s15, 0
    %p61 = por %p59, %p60
    %p62 = scmp.ne.s32.totalorder %s51, %s54
    %p63 = scmp.eq.s32.totalorder %s20, 3
    %p64 = por %p62, %p63
    %p65 = scmp.ne.s32.totalorder %s54, %s55
    %p66 = scmp.eq.s32.totalorder %s20, 0
    %p67 = por %p65, %p66
    %p68 = scmp.ne.s32.totalorder %s54, %s55
    %p69 = scmp.eq.s32.totalorder %s21, 3
    %p70 = por %p68, %p69
    %p72 = scmp.ne.s32.totalorder %s55, %s71
    %p73 = scmp.eq.s32.totalorder %s21, 0
    %p74 = por %p72, %p73
    %s76 = sadd.s32 %s75, 1
    %p79 = scmp.eq.s32.totalorder %s15, 3
    %p80 = scmp.ne.s32.totalorder %s75, %s77
    %p81 = scmp.eq.s32.totalorder %s15, 0
    %p82 = por %p80, %p81
    %p83 = scmp.ne.s32.totalorder %s75, %s77
    %p84 = scmp.eq.s32.totalorder %s20, 3
    %p85 = por %p83, %p84
    %p86 = scmp.ne.s32.totalorder %s77, %s78
    %p87 = scmp.eq.s32.totalorder %s20, 0
    %p88 = por %p86, %p87
    %p89 = scmp.ne.s32.totalorder %s77, %s78
    %p90 = scmp.eq.s32.totalorder %s21, 3
    %p91 = por %p89, %p90
    %p93 = scmp.ne.s32.totalorder %s78, %s92
    %p94 = scmp.eq.s32.totalorder %s21, 0
    %p95 = por %p93, %p94
    %s97 = sadd.s32 %s96, 1
    %p100 = scmp.eq.s32.totalorder %s15, 3
    %p101 = scmp.ne.s32.totalorder %s96, %s98
    %p102 = scmp.eq.s32.totalorder %s15, 0
    %p103 = por %p101, %p102
    %p104 = scmp.ne.s32.totalorder %s96, %s98
    %p105 = scmp.eq.s32.totalorder %s20, 3
    %p106 = por %p104, %p105
    %p107 = scmp.ne.s32.totalorder %s98, %s99
    %p108 = scmp.eq.s32.totalorder %s20, 0
    %p109 = por %p107, %p108
    %p110 = scmp.ne.s32.totalorder %s98, %s99
    %p111 = scmp.eq.s32.totalorder %s21, 3
    %p112 = por %p110, %p111
    %p114 = scmp.ne.s32.totalorder %s99, %s113
    %p115 = scmp.eq.s32.totalorder %s21, 0
    %p116 = por %p114, %p115
    %s118 = sadd.s32 %s117, 1
    %p121 = scmp.eq.s32.totalorder %s15, 3
    %p122 = scmp.ne.s32.totalorder %s117, %s119
    %p123 = scmp.eq.s32.totalorder %s15, 0
    %p124 = por %p122, %p123
    %p125 = scmp.ne.s32.totalorder %s117, %s119
    %p126 = scmp.eq.s32.totalorder %s20, 3
    %p127 = por %p125, %p126
    %p128 = scmp.ne.s32.totalorder %s119, %s120
    %p129 = scmp.eq.s32.totalorder %s20, 0
    %p130 = por %p128, %p129
    %p131 = scmp.ne.s32.totalorder %s119, %s120
    %p132 = scmp.eq.s32.totalorder %s21, 3
    %p133 = por %p131, %p132
    %p135 = scmp.ne.s32.totalorder %s120, %s134
    %p136 = scmp.eq.s32.totalorder %s21, 0
    %p137 = por %p135, %p136
    %s139 = sadd.s32 %s138, 1
    %p142 = scmp.eq.s32.totalorder %s15, 3
    %p143 = scmp.ne.s32.totalorder %s138, %s140
    %p144 = scmp.eq.s32.totalorder %s15, 0
    %p145 = por %p143, %p144
    %p146 = scmp.ne.s32.totalorder %s138, %s140
    %p147 = scmp.eq.s32.totalorder %s20, 3
    %p148 = por %p146, %p147
    %p149 = scmp.ne.s32.totalorder %s140, %s141
    %p150 = scmp.eq.s32.totalorder %s20, 0
    %p151 = por %p149, %p150
    %p152 = scmp.ne.s32.totalorder %s140, %s141
    %p153 = scmp.eq.s32.totalorder %s21, 3
    %p154 = por %p152, %p153
    %p156 = scmp.ne.s32.totalorder %s141, %s155
    %p157 = scmp.eq.s32.totalorder %s21, 0
    %p158 = por %p156, %p157
    %s160 = sadd.s32 %s159, 1
    %p163 = scmp.eq.s32.totalorder %s15, 3
    %p164 = scmp.ne.s32.totalorder %s159, %s161
    %p165 = scmp.eq.s32.totalorder %s15, 0
    %p166 = por %p164, %p165
    %p167 = scmp.ne.s32.totalorder %s159, %s161
    %p168 = scmp.eq.s32.totalorder %s20, 3
    %p169 = por %p167, %p168
    %p170 = scmp.ne.s32.totalorder %s161, %s162
    %p171 = scmp.eq.s32.totalorder %s20, 0
    %p172 = por %p170, %p171
    %p173 = scmp.ne.s32.totalorder %s161, %s162
    %p174 = scmp.eq.s32.totalorder %s21, 3
    %p175 = por %p173, %p174
    %p177 = scmp.ne.s32.totalorder %s162, %s176
    %p178 = scmp.eq.s32.totalorder %s21, 0
    %p179 = por %p177, %p178
    %s180 = ssub.s32 %s15, %s22
    %p181 = scmp.eq.s32.totalorder %s180, 0
    %s183 = sadd.s32 %s182, 1
    %s184 = scalar_select %p181, %s182, %s183
    %p187 = pneg %p181
    %p188 = scmp.eq.s32.totalorder %s15, 3
    %p189 = por %p187, %p188
    %p190 = scmp.ne.s32.totalorder %s182, %s185
    %p191 = scmp.eq.s32.totalorder %s15, 0
    %p192 = por %p190, %p191
    %p193 = scmp.ne.s32.totalorder %s182, %s185
    %p194 = scmp.eq.s32.totalorder %s20, 3
    %p195 = por %p193, %p194
    %p196 = scmp.ne.s32.totalorder %s185, %s186
    %p197 = scmp.eq.s32.totalorder %s20, 0
    %p198 = por %p196, %p197
    %p199 = scmp.ne.s32.totalorder %s185, %s186
    %p200 = scmp.eq.s32.totalorder %s21, 3
    %p201 = por %p199, %p200
    %p203 = scmp.ne.s32.totalorder %s186, %s202
    %p204 = scmp.eq.s32.totalorder %s21, 0
    %p205 = por %p203, %p204
    %p206 = scmp.le.s32.totalorder 1, %s15
    %p207 = scmp.lt.s32.totalorder %s15, 5
    %p208 = pnand %p206, %p207
    %p209 = pneg %p208
    // Predicated region
    $region9: #{tpu_custom_call.1} parent=5 // pred_check
      _
    $region10: #{tpu_custom_call.1} parent=5 // pred_check_branch
      %211 = sbr.rel (%p208) target = $region12
    $region11: #{tpu_custom_call.1} parent=5 // pred_region
      %s212 = ssub.s32 %s15, 1
      // Predicated region
      $region13: #{tpu_custom_call.1} parent=11 // pred_check
        %p213 = pneg %p88
      $region14: #{tpu_custom_call.1} parent=11 // pred_check_branch
        %215 = sbr.rel (%p213) target = $region16
      $region15: #{tpu_custom_call.1} parent=11 // pred_region
        _
      $region16: #{tpu_custom_call.1} parent=11 // pred_fallthru
        _
      // Predicated region
      $region17: #{tpu_custom_call.1} parent=11 // pred_check
        %p216 = pneg %p109
      $region18: #{tpu_custom_call.1} parent=11 // pred_check_branch
        %218 = sbr.rel (%p216) target = $region20
      $region19: #{tpu_custom_call.1} parent=11 // pred_region
        _
      $region20: #{tpu_custom_call.1} parent=11 // pred_fallthru
        _
      // Predicated region
      $region21: #{tpu_custom_call.1} parent=11 // pred_check
        %p219 = pneg %p130
      $region22: #{tpu_custom_call.1} parent=11 // pred_check_branch
        %221 = sbr.rel (%p219) target = $region24
      $region23: #{tpu_custom_call.1} parent=11 // pred_region
        _
      $region24: #{tpu_custom_call.1} parent=11 // pred_fallthru
        _
      // Predicated region
      $region25: #{tpu_custom_call.1} parent=11 // pred_check
        %p222 = pneg %p151
      $region26: #{tpu_custom_call.1} parent=11 // pred_check_branch
        %224 = sbr.rel (%p222) target = $region28
      $region27: #{tpu_custom_call.1} parent=11 // pred_region
        _
      $region28: #{tpu_custom_call.1} parent=11 // pred_fallthru
        _
      // Predicated region
      $region29: #{tpu_custom_call.1} parent=11 // pred_check
        %p225 = pneg %p172
      $region30: #{tpu_custom_call.1} parent=11 // pred_check_branch
        %227 = sbr.rel (%p225) target = $region32
      $region31: #{tpu_custom_call.1} parent=11 // pred_region
        _
      $region32: #{tpu_custom_call.1} parent=11 // pred_fallthru
        _
    $region12: #{tpu_custom_call.1} parent=5 // pred_fallthru
      _
    %p228 = scmp.lt.s32.totalorder %s15, 4
    // Predicated region
    $region33: #{tpu_custom_call.1} parent=5 // pred_check
      %p229 = pneg %p228
    $region34: #{tpu_custom_call.1} parent=5 // pred_check_branch
      %231 = sbr.rel (%p229) target = $region36
    $region35: #{tpu_custom_call.1} parent=5 // pred_region
      // Predicated region
      $region37: #{tpu_custom_call.1} parent=35 // pred_check
        %p232 = pneg %p35
      $region38: #{tpu_custom_call.1} parent=35 // pred_check_branch
        %234 = sbr.rel (%p232) target = $region40
      $region39: #{tpu_custom_call.1} parent=35 // pred_region
        %s235 = smul.u32 16, %s15
        %p236 = scmp.lt.s32.totalorder %s235, 63
        %s237 = scalar_select %p236, %s235, 63
        %s238 = smul.addr %s237, 8
        %s239 = scalar_lea.vmem %s0, %s238
        %s240 = smul.u32 16, %s15
      $region40: #{tpu_custom_call.1} parent=35 // pred_fallthru
        _
      // Predicated region
      $region41: #{tpu_custom_call.1} parent=35 // pred_check
        %p241 = pneg %p61
      $region42: #{tpu_custom_call.1} parent=35 // pred_check_branch
        %243 = sbr.rel (%p241) target = $region44
      $region43: #{tpu_custom_call.1} parent=35 // pred_region
        %s244 = smul.u32 16, %s15
        %p245 = scmp.lt.s32.totalorder %s244, 63
        %s246 = scalar_select %p245, %s244, 63
        %s247 = smul.addr %s246, 8
        %s248 = scalar_lea.vmem %s1, %s247
        %s249 = smul.u32 16, %s15
      $region44: #{tpu_custom_call.1} parent=35 // pred_fallthru
        _
    $region36: #{tpu_custom_call.1} parent=5 // pred_fallthru
      _
    %p250 = scmp.le.s32.totalorder 1, %s15
    %p251 = scmp.lt.s32.totalorder %s15, 5
    %p252 = pnand %p250, %p251
    %p253 = pneg %p252
    // Predicated region
    $region45: #{tpu_custom_call.1} parent=5 // pred_check
      _
    $region46: #{tpu_custom_call.1} parent=5 // pred_check_branch
      %255 = sbr.rel (%p252) target = $region48
    $region47: #{tpu_custom_call.1} parent=5 // pred_region
      %s256 = ssub.s32 %s15, 1
      %s257 = smul.u32 16, %s20
      %p258 = scmp.lt.s32.totalorder %s257, 63
      %s259 = scalar_select %p258, %s257, 63
      %s260 = smul.addr %s259, 8
      %s261 = scalar_lea.vmem %s0, %s260
      %p262 = pneg %p41
      %p263 = pneg %p38
      %s264 = smul.u32 16, %s20
      %p265 = scmp.lt.s32.totalorder %s264, 63
      %s266 = scalar_select %p265, %s264, 63
      %s267 = smul.addr %s266, 8
      %s268 = scalar_lea.vmem %s1, %s267
      %p269 = pneg %p67
      %p270 = pneg %p64
      %p271 = pneg %p88
      %p272 = pneg %p85
      %p273 = pneg %p109
      %p274 = pneg %p106
      %p275 = pneg %p130
      %p276 = pneg %p127
      %p277 = pneg %p151
      %p278 = pneg %p148
      %p279 = pneg %p172
      %p280 = pneg %p169
      %p281 = pneg %p198
      %p282 = pneg %p195
      %s283 = smul.u32 16, %s20
      %p284 = scmp.lt.s32.totalorder %s283, 63
      %s285 = scalar_select %p284, %s283, 63
      %s286 = smul.addr %s285, 8
      %s287 = scalar_lea.vmem %s7, %s286
      %s288 = smul.u32 16, %s20
      %p289 = scmp.lt.s32.totalorder %s288, 63
      %s290 = scalar_select %p289, %s288, 63
      %s291 = smul.addr %s290, 8
      %s292 = scalar_lea.vmem %s0, %s291
      %s293 = smul.u32 16, %s20
      %s294 = smul.u32 16, %s20
      %p295 = scmp.lt.s32.totalorder %s294, 63
      %s296 = scalar_select %p295, %s294, 63
      %s297 = smul.addr %s296, 8
      %s298 = scalar_lea.vmem %s1, %s297
      %s299 = smul.u32 16, %s20
      %s300 = smul.u32 16, %s20
      %p301 = scmp.lt.s32.totalorder %s300, 63
      %s302 = scalar_select %p301, %s300, 63
      %s303 = smul.addr %s302, 8
      %s304 = scalar_lea.vmem %s7, %s303
      %s305 = smul.u32 16, %s20
      %v306 = vld [vmem:[%s298] sm:$0xff]
      %v307 = vld [vmem:[%s298 + $0x8] sm:$0xff]
      %v308 = vld [vmem:[%s298 + $0x10] sm:$0xff]
      %v309 = vld [vmem:[%s298 + $0x18] sm:$0xff]
      %v310 = vld [vmem:[%s298 + $0x20] sm:$0xff]
      %v311 = vld [vmem:[%s298 + $0x28] sm:$0xff]
      %v312 = vld [vmem:[%s298 + $0x30] sm:$0xff]
      %v313 = vld [vmem:[%s298 + $0x38] sm:$0xff]
      %v314 = vld [vmem:[%s298 + $0x40] sm:$0xff]
      %v315 = vld [vmem:[%s298 + $0x48] sm:$0xff]
      %v316 = vld [vmem:[%s298 + $0x50] sm:$0xff]
      %v317 = vld [vmem:[%s298 + $0x58] sm:$0xff]
      %v318 = vld [vmem:[%s298 + $0x60] sm:$0xff]
      %v319 = vld [vmem:[%s298 + $0x68] sm:$0xff]
      %v320 = vld [vmem:[%s298 + $0x70] sm:$0xff]
      %v321 = vld [vmem:[%s298 + $0x78] sm:$0xff]
      %v322 = vld [vmem:[%s292] sm:$0xff]
      %v323 = vld [vmem:[%s292 + $0x8] sm:$0xff]
      %v324 = vld [vmem:[%s292 + $0x10] sm:$0xff]
      %v325 = vld [vmem:[%s292 + $0x18] sm:$0xff]
      %v326 = vld [vmem:[%s292 + $0x20] sm:$0xff]
      %v327 = vld [vmem:[%s292 + $0x28] sm:$0xff]
      %v328 = vld [vmem:[%s292 + $0x30] sm:$0xff]
      %v329 = vld [vmem:[%s292 + $0x38] sm:$0xff]
      %v330 = vld [vmem:[%s292 + $0x40] sm:$0xff]
      %v331 = vld [vmem:[%s292 + $0x48] sm:$0xff]
      %v332 = vld [vmem:[%s292 + $0x50] sm:$0xff]
      %v333 = vld [vmem:[%s292 + $0x58] sm:$0xff]
      %v334 = vld [vmem:[%s292 + $0x60] sm:$0xff]
      %v335 = vld [vmem:[%s292 + $0x68] sm:$0xff]
      %v336 = vld [vmem:[%s292 + $0x70] sm:$0xff]
      %v337 = vld [vmem:[%s292 + $0x78] sm:$0xff]
      %v338 = vld [vmem:[%s2] sm:$0xf]
      %v339 = vld [vmem:[%s3] sm:$0xf]
      %vm340 = vcmask 31744
      %v342 = vsel %vm340, %v306, 0
      %v345 = vsel %vm340, %v307, 0
      %v348 = vsel %vm340, %v308, 0
      %v351 = vsel %vm340, %v309, 0
      %v354 = vsel %vm340, %v310, 0
      %v357 = vsel %vm340, %v311, 0
      %v360 = vsel %vm340, %v312, 0
      %v363 = vsel %vm340, %v313, 0
      %v366 = vsel %vm340, %v314, 0
      %v369 = vsel %vm340, %v315, 0
      %v372 = vsel %vm340, %v316, 0
      %v375 = vsel %vm340, %v317, 0
      %v378 = vsel %vm340, %v318, 0
      %v381 = vsel %vm340, %v319, 0
      %v384 = vsel %vm340, %v320, 0
      %v387 = vsel %vm340, %v321, 0
      %vm389 = vcmask 1043456
      %v391 = vsel %vm389, %v339, 0
      %393 = vmatprep.subr.mxu0 0.0
      %394 = vmatpush1.msra.mxu0 %v391
      %395 = vmatprep.subr.mxu0 0.0
      %396 = vmatpush1.msra.mxu0 0.0
      %397 = vmatprep.subr.mxu0 0.0
      %398 = vmatpush1.msra.mxu0 0.0
      %399 = vmatprep.subr.mxu0 0.0
      %400 = vmatpush1.msra.mxu0 0.0
      %401 = vmatprep.subr.mxu0 0.0
      %402 = vmatpush1.msra.mxu0 0.0
      %403 = vmatprep.subr.mxu0 0.0
      %404 = vmatpush1.msra.mxu0 0.0
      %405 = vmatprep.subr.mxu0 0.0
      %406 = vmatpush1.msra.mxu0 0.0
      %407 = vmatprep.subr.mxu0 0.0
      %408 = vmatpush1.msra.mxu0 0.0
      %409 = vmatprep.subr.mxu0 0.0
      %410 = vmatpush1.msra.mxu0 0.0
      %411 = vmatprep.subr.mxu0 0.0
      %412 = vmatpush1.msra.mxu0 0.0
      %413 = vmatprep.subr.mxu0 0.0
      %414 = vmatpush1.msra.mxu0 0.0
      %415 = vmatprep.subr.mxu0 0.0
      %416 = vmatpush1.msra.mxu0 0.0
      %417 = vmatprep.subr.mxu0 0.0
      %418 = vmatpush1.msra.mxu0 0.0
      %419 = vmatprep.subr.mxu0 0.0
      %420 = vmatpush1.msra.mxu0 0.0
      %421 = vmatprep.subr.mxu0 0.0
      %422 = vmatpush1.msra.mxu0 0.0
      %423 = vmatprep.subr.mxu0 0.0
      %424 = vmatpush1.msra.mxu0 0.0
      %425 = vmatprep.subr.mxu0 0.0
      %426 = vmatpush1.msra.mxu0 0.0
      %427 = vmatprep.subr.mxu0 0.0
      %428 = vmatpush1.msra.mxu0 0.0
      %429 = vmatprep.subr.mxu0 0.0
      %430 = vmatpush1.msra.mxu0 0.0
      %431 = vmatprep.subr.mxu0 0.0
      %432 = vmatpush1.msra.mxu0 0.0
      %433 = vmatprep.subr.mxu0 0.0
      %434 = vmatpush1.msra.mxu0 0.0
      %435 = vmatprep.subr.mxu0 0.0
      %436 = vmatpush1.msra.mxu0 0.0
      %437 = vmatprep.subr.mxu0 0.0
      %438 = vmatpush1.msra.mxu0 0.0
      %439 = vmatprep.subr.mxu0 0.0
      %440 = vmatpush1.msra.mxu0 0.0
      %441 = vmatprep.subr.mxu0 0.0
      %442 = vmatpush1.msra.mxu0 0.0
      %443 = vmatprep.subr.mxu0 0.0
      %444 = vmatpush1.msra.mxu0 0.0
      %445 = vmatprep.subr.mxu0 0.0
      %446 = vmatpush1.msra.mxu0 0.0
      %447 = vmatprep.subr.mxu0 0.0
      %448 = vmatpush1.msra.mxu0 0.0
      %449 = vmatprep.subr.mxu0 0.0
      %450 = vmatpush1.msra.mxu0 0.0
      %451 = vmatprep.subr.mxu0 0.0
      %452 = vmatpush1.msra.mxu0 0.0
      %453 = vmatprep.subr.mxu0 0.0
      %454 = vmatpush1.msra.mxu0 0.0
      %455 = vmatprep.subr.mxu0 0.0
      %456 = vmatpush1.msra.mxu0 0.0
      %457 = vmatprep.mubr.f32.mxu0 0.0
      %458 = vmatmul.mubr.f32.gmra.mrb[0].mxu0 %v342
      %v459 = vpop.f32.mrb[0].mxu0
      %v460 = vadd.f32 0.0, %v459
      %v461 = vpop.f32.mrb[0].mxu0
      %462 = vmatprep.mubr.f32.mxu0 0.0
      %463 = vmatmul.mubr.f32.gmra.mrb[0].mxu0 %v345
      %v464 = vpop.f32.mrb[0].mxu0
      %v465 = vadd.f32 0.0, %v464
      %v466 = vpop.f32.mrb[0].mxu0
      %467 = vmatprep.mubr.f32.mxu0 0.0
      %468 = vmatmul.mubr.f32.gmra.mrb[0].mxu0 %v348
      %v469 = vpop.f32.mrb[0].mxu0
      %v470 = vadd.f32 0.0, %v469
      %v471 = vpop.f32.mrb[0].mxu0
      %472 = vmatprep.mubr.f32.mxu0 0.0
      %473 = vmatmul.mubr.f32.gmra.mrb[0].mxu0 %v351
      %v474 = vpop.f32.mrb[0].mxu0
      %v475 = vadd.f32 0.0, %v474
      %v476 = vpop.f32.mrb[0].mxu0
      %477 = vmatprep.mubr.f32.mxu0 0.0
      %478 = vmatmul.mubr.f32.gmra.mrb[0].mxu0 %v354
      %v479 = vpop.f32.mrb[0].mxu0
      %v480 = vadd.f32 0.0, %v479
      %v481 = vpop.f32.mrb[0].mxu0
      %482 = vmatprep.mubr.f32.mxu0 0.0
      %483 = vmatmul.mubr.f32.gmra.mrb[0].mxu0 %v357
      %v484 = vpop.f32.mrb[0].mxu0
      %v485 = vadd.f32 0.0, %v484
      %v486 = vpop.f32.mrb[0].mxu0
      %487 = vmatprep.mubr.f32.mxu0 0.0
      %488 = vmatmul.mubr.f32.gmra.mrb[0].mxu0 %v360
      %v489 = vpop.f32.mrb[0].mxu0
      %v490 = vadd.f32 0.0, %v489
      %v491 = vpop.f32.mrb[0].mxu0
      %492 = vmatprep.mubr.f32.mxu0 0.0
      %493 = vmatmul.mubr.f32.gmra.mrb[0].mxu0 %v363
      %v494 = vpop.f32.mrb[0].mxu0
      %v495 = vadd.f32 0.0, %v494
      %v496 = vpop.f32.mrb[0].mxu0
      %497 = vmatprep.mubr.f32.mxu0 0.0
      %498 = vmatmul.mubr.f32.gmra.mrb[0].mxu0 %v366
      %v499 = vpop.f32.mrb[0].mxu0
      %v500 = vadd.f32 0.0, %v499
      %v501 = vpop.f32.mrb[0].mxu0
      %502 = vmatprep.mubr.f32.mxu0 0.0
      %503 = vmatmul.mubr.f32.gmra.mrb[0].mxu0 %v369
      %v504 = vpop.f32.mrb[0].mxu0
      %v505 = vadd.f32 0.0, %v504
      %v506 = vpop.f32.mrb[0].mxu0
      %507 = vmatprep.mubr.f32.mxu0 0.0
      %508 = vmatmul.mubr.f32.gmra.mrb[0].mxu0 %v372
      %v509 = vpop.f32.mrb[0].mxu0
      %v510 = vadd.f32 0.0, %v509
      %v511 = vpop.f32.mrb[0].mxu0
      %512 = vmatprep.mubr.f32.mxu0 0.0
      %513 = vmatmul.mubr.f32.gmra.mrb[0].mxu0 %v375
      %v514 = vpop.f32.mrb[0].mxu0
      %v515 = vadd.f32 0.0, %v514
      %v516 = vpop.f32.mrb[0].mxu0
      %517 = vmatprep.mubr.f32.mxu0 0.0
      %518 = vmatmul.mubr.f32.gmra.mrb[0].mxu0 %v378
      %v519 = vpop.f32.mrb[0].mxu0
      %v520 = vadd.f32 0.0, %v519
      %v521 = vpop.f32.mrb[0].mxu0
      %522 = vmatprep.mubr.f32.mxu0 0.0
      %523 = vmatmul.mubr.f32.gmra.mrb[0].mxu0 %v381
      %v524 = vpop.f32.mrb[0].mxu0
      %v525 = vadd.f32 0.0, %v524
      %v526 = vpop.f32.mrb[0].mxu0
      %527 = vmatprep.mubr.f32.mxu0 0.0
      %528 = vmatmul.mubr.f32.gmra.mrb[0].mxu0 %v384
      %v529 = vpop.f32.mrb[0].mxu0
      %v530 = vadd.f32 0.0, %v529
      %v531 = vpop.f32.mrb[0].mxu0
      %532 = vmatprep.mubr.f32.mxu0 0.0
      %533 = vmatmul.mubr.f32.gmra.mrb[0].mxu0 %v387
      %v534 = vpop.f32.mrb[0].mxu0
      %v535 = vadd.f32 0.0, %v534
      %v536 = vpop.f32.mrb[0].mxu0
      %537 = vdwg.mxu0
      %v539 = vsel %vm340, %v322, 0
      %v542 = vsel %vm340, %v323, 0
      %v545 = vsel %vm340, %v324, 0
      %v548 = vsel %vm340, %v325, 0
      %v551 = vsel %vm340, %v326, 0
      %v554 = vsel %vm340, %v327, 0
      %v557 = vsel %vm340, %v328, 0
      %v560 = vsel %vm340, %v329, 0
      %v563 = vsel %vm340, %v330, 0
      %v566 = vsel %vm340, %v331, 0
      %v569 = vsel %vm340, %v332, 0
      %v572 = vsel %vm340, %v333, 0
      %v575 = vsel %vm340, %v334, 0
      %v578 = vsel %vm340, %v335, 0
      %v581 = vsel %vm340, %v336, 0
      %v584 = vsel %vm340, %v337, 0
      %v587 = vsel %vm389, %v338, 0
      %589 = vmatprep.subr.mxu0 0.0
      %590 = vmatpush1.msra.mxu0 %v587
      %591 = vmatprep.subr.mxu0 0.0
      %592 = vmatpush1.msra.mxu0 0.0
      %593 = vmatprep.subr.mxu0 0.0
      %594 = vmatpush1.msra.mxu0 0.0
      %595 = vmatprep.subr.mxu0 0.0
      %596 = vmatpush1.msra.mxu0 0.0
      %597 = vmatprep.subr.mxu0 0.0
      %598 = vmatpush1.msra.mxu0 0.0
      %599 = vmatprep.subr.mxu0 0.0
      %600 = vmatpush1.msra.mxu0 0.0
      %601 = vmatprep.subr.mxu0 0.0
      %602 = vmatpush1.msra.mxu0 0.0
      %603 = vmatprep.subr.mxu0 0.0
      %604 = vmatpush1.msra.mxu0 0.0
      %605 = vmatprep.subr.mxu0 0.0
      %606 = vmatpush1.msra.mxu0 0.0
      %607 = vmatprep.subr.mxu0 0.0
      %608 = vmatpush1.msra.mxu0 0.0
      %609 = vmatprep.subr.mxu0 0.0
      %610 = vmatpush1.msra.mxu0 0.0
      %611 = vmatprep.subr.mxu0 0.0
      %612 = vmatpush1.msra.mxu0 0.0
      %613 = vmatprep.subr.mxu0 0.0
      %614 = vmatpush1.msra.mxu0 0.0
      %615 = vmatprep.subr.mxu0 0.0
      %616 = vmatpush1.msra.mxu0 0.0
      %617 = vmatprep.subr.mxu0 0.0
      %618 = vmatpush1.msra.mxu0 0.0
      %619 = vmatprep.subr.mxu0 0.0
      %620 = vmatpush1.msra.mxu0 0.0
      %621 = vmatprep.subr.mxu0 0.0
      %622 = vmatpush1.msra.mxu0 0.0
      %623 = vmatprep.subr.mxu0 0.0
      %624 = vmatpush1.msra.mxu0 0.0
      %625 = vmatprep.subr.mxu0 0.0
      %626 = vmatpush1.msra.mxu0 0.0
      %627 = vmatprep.subr.mxu0 0.0
      %628 = vmatpush1.msra.mxu0 0.0
      %629 = vmatprep.subr.mxu0 0.0
      %630 = vmatpush1.msra.mxu0 0.0
      %631 = vmatprep.subr.mxu0 0.0
      %632 = vmatpush1.msra.mxu0 0.0
      %633 = vmatprep.subr.mxu0 0.0
      %634 = vmatpush1.msra.mxu0 0.0
      %635 = vmatprep.subr.mxu0 0.0
      %636 = vmatpush1.msra.mxu0 0.0
      %637 = vmatprep.subr.mxu0 0.0
      %638 = vmatpush1.msra.mxu0 0.0
      %639 = vmatprep.subr.mxu0 0.0
      %640 = vmatpush1.msra.mxu0 0.0
      %641 = vmatprep.subr.mxu0 0.0
      %642 = vmatpush1.msra.mxu0 0.0
      %643 = vmatprep.subr.mxu0 0.0
      %644 = vmatpush1.msra.mxu0 0.0
      %645 = vmatprep.subr.mxu0 0.0
      %646 = vmatpush1.msra.mxu0 0.0
      %647 = vmatprep.subr.mxu0 0.0
      %648 = vmatpush1.msra.mxu0 0.0
      %649 = vmatprep.subr.mxu0 0.0
      %650 = vmatpush1.msra.mxu0 0.0
      %651 = vmatprep.subr.mxu0 0.0
      %652 = vmatpush1.msra.mxu0 0.0
      %653 = vmatprep.mubr.f32.mxu0 0.0
      %654 = vmatmul.mubr.f32.gmra.mrb[0].mxu0 %v539
      %v655 = vpop.f32.mrb[0].mxu0
      %v656 = vadd.f32 %v460, %v655
      %v657 = vpop.f32.mrb[0].mxu0
      %658 = vmatprep.mubr.f32.mxu0 0.0
      %659 = vmatmul.mubr.f32.gmra.mrb[0].mxu0 %v542
      %v660 = vpop.f32.mrb[0].mxu0
      %v661 = vadd.f32 %v465, %v660
      %v662 = vpop.f32.mrb[0].mxu0
      %663 = vmatprep.mubr.f32.mxu0 0.0
      %664 = vmatmul.mubr.f32.gmra.mrb[0].mxu0 %v545
      %v665 = vpop.f32.mrb[0].mxu0
      %v666 = vadd.f32 %v470, %v665
      %v667 = vpop.f32.mrb[0].mxu0
      %668 = vmatprep.mubr.f32.mxu0 0.0
      %669 = vmatmul.mubr.f32.gmra.mrb[0].mxu0 %v548
      %v670 = vpop.f32.mrb[0].mxu0
      %v671 = vadd.f32 %v475, %v670
      %v672 = vpop.f32.mrb[0].mxu0
      %673 = vmatprep.mubr.f32.mxu0 0.0
      %674 = vmatmul.mubr.f32.gmra.mrb[0].mxu0 %v551
      %v675 = vpop.f32.mrb[0].mxu0
      %v676 = vadd.f32 %v480, %v675
      %v677 = vpop.f32.mrb[0].mxu0
      %678 = vmatprep.mubr.f32.mxu0 0.0
      %679 = vmatmul.mubr.f32.gmra.mrb[0].mxu0 %v554
      %v680 = vpop.f32.mrb[0].mxu0
      %v681 = vadd.f32 %v485, %v680
      %v682 = vpop.f32.mrb[0].mxu0
      %683 = vmatprep.mubr.f32.mxu0 0.0
      %684 = vmatmul.mubr.f32.gmra.mrb[0].mxu0 %v557
      %v685 = vpop.f32.mrb[0].mxu0
      %v686 = vadd.f32 %v490, %v685
      %v687 = vpop.f32.mrb[0].mxu0
      %688 = vmatprep.mubr.f32.mxu0 0.0
      %689 = vmatmul.mubr.f32.gmra.mrb[0].mxu0 %v560
      %v690 = vpop.f32.mrb[0].mxu0
      %v691 = vadd.f32 %v495, %v690
      %v692 = vpop.f32.mrb[0].mxu0
      %693 = vmatprep.mubr.f32.mxu0 0.0
      %694 = vmatmul.mubr.f32.gmra.mrb[0].mxu0 %v563
      %v695 = vpop.f32.mrb[0].mxu0
      %v696 = vadd.f32 %v500, %v695
      %v697 = vpop.f32.mrb[0].mxu0
      %698 = vmatprep.mubr.f32.mxu0 0.0
      %699 = vmatmul.mubr.f32.gmra.mrb[0].mxu0 %v566
      %v700 = vpop.f32.mrb[0].mxu0
      %v701 = vadd.f32 %v505, %v700
      %v702 = vpop.f32.mrb[0].mxu0
      %703 = vmatprep.mubr.f32.mxu0 0.0
      %704 = vmatmul.mubr.f32.gmra.mrb[0].mxu0 %v569
      %v705 = vpop.f32.mrb[0].mxu0
      %v706 = vadd.f32 %v510, %v705
      %v707 = vpop.f32.mrb[0].mxu0
      %708 = vmatprep.mubr.f32.mxu0 0.0
      %709 = vmatmul.mubr.f32.gmra.mrb[0].mxu0 %v572
      %v710 = vpop.f32.mrb[0].mxu0
      %v711 = vadd.f32 %v515, %v710
      %v712 = vpop.f32.mrb[0].mxu0
      %713 = vmatprep.mubr.f32.mxu0 0.0
      %714 = vmatmul.mubr.f32.gmra.mrb[0].mxu0 %v575
      %v715 = vpop.f32.mrb[0].mxu0
      %v716 = vadd.f32 %v520, %v715
      %v717 = vpop.f32.mrb[0].mxu0
      %718 = vmatprep.mubr.f32.mxu0 0.0
      %719 = vmatmul.mubr.f32.gmra.mrb[0].mxu0 %v578
      %v720 = vpop.f32.mrb[0].mxu0
      %v721 = vadd.f32 %v525, %v720
      %v722 = vpop.f32.mrb[0].mxu0
      %723 = vmatprep.mubr.f32.mxu0 0.0
      %724 = vmatmul.mubr.f32.gmra.mrb[0].mxu0 %v581
      %v725 = vpop.f32.mrb[0].mxu0
      %v726 = vadd.f32 %v530, %v725
      %v727 = vpop.f32.mrb[0].mxu0
      %728 = vmatprep.mubr.f32.mxu0 0.0
      %729 = vmatmul.mubr.f32.gmra.mrb[0].mxu0 %v584
      %v730 = vpop.f32.mrb[0].mxu0
      %v731 = vadd.f32 %v535, %v730
      %v732 = vpop.f32.mrb[0].mxu0
      %733 = vdwg.mxu0
      %v734 = vld [vmem:[%s4] sm:$0x1]
      %v736 = vlaneseq
      %v737 = vshrl.u32 %v736, 7
      %v738 = vsub.s32 0, %v737
      %v739 = vrot.slane %v734, %v738
      %v741 = vadd.f32 %v656, %v739
      %v742 = vadd.f32 %v661, %v739
      %v743 = vadd.f32 %v666, %v739
      %v744 = vadd.f32 %v671, %v739
      %v745 = vadd.f32 %v676, %v739
      %v746 = vadd.f32 %v681, %v739
      %v747 = vadd.f32 %v686, %v739
      %v748 = vadd.f32 %v691, %v739
      %v749 = vadd.f32 %v696, %v739
      %v750 = vadd.f32 %v701, %v739
      %v751 = vadd.f32 %v706, %v739
      %v752 = vadd.f32 %v711, %v739
      %v753 = vadd.f32 %v716, %v739
      %v754 = vadd.f32 %v721, %v739
      %v755 = vadd.f32 %v726, %v739
      %v756 = vadd.f32 %v731, %v739
      %v757 = vmax.f32 %v741, 0.0
      %v758 = vmax.f32 %v742, 0.0
      %v759 = vmax.f32 %v743, 0.0
      %v760 = vmax.f32 %v744, 0.0
      %v761 = vmax.f32 %v745, 0.0
      %v762 = vmax.f32 %v746, 0.0
      %v763 = vmax.f32 %v747, 0.0
      %v764 = vmax.f32 %v748, 0.0
      %v765 = vmax.f32 %v749, 0.0
      %v766 = vmax.f32 %v750, 0.0
      %v767 = vmax.f32 %v751, 0.0
      %v768 = vmax.f32 %v752, 0.0
      %v769 = vmax.f32 %v753, 0.0
      %v770 = vmax.f32 %v754, 0.0
      %v771 = vmax.f32 %v755, 0.0
      %v772 = vmax.f32 %v756, 0.0
      %v773 = vld [vmem:[%s5] sm:$0x1]
      %v775 = vlaneseq
      %v776 = vshrl.u32 %v775, 7
      %v777 = vsub.s32 0, %v776
      %v778 = vrot.slane %v773, %v777
      %v780 = vmul.f32 %v757, %v778
      %v781 = vmul.f32 %v758, %v778
      %v782 = vmul.f32 %v759, %v778
      %v783 = vmul.f32 %v760, %v778
      %v784 = vmul.f32 %v761, %v778
      %v785 = vmul.f32 %v762, %v778
      %v786 = vmul.f32 %v763, %v778
      %v787 = vmul.f32 %v764, %v778
      %v788 = vmul.f32 %v765, %v778
      %v789 = vmul.f32 %v766, %v778
      %v790 = vmul.f32 %v767, %v778
      %v791 = vmul.f32 %v768, %v778
      %v792 = vmul.f32 %v769, %v778
      %v793 = vmul.f32 %v770, %v778
      %v794 = vmul.f32 %v771, %v778
      %v795 = vmul.f32 %v772, %v778
      %796 = vadd.xlane.f32.xlu0 %v780
      %v797 = vpop.xlane.xlu0 %796
      %798 = vadd.xlane.f32.xlu0 %v781
      %v799 = vpop.xlane.xlu0 %798
      %800 = vadd.xlane.f32.xlu0 %v782
      %v801 = vpop.xlane.xlu0 %800
      %802 = vadd.xlane.f32.xlu0 %v783
      %v803 = vpop.xlane.xlu0 %802
      %804 = vadd.xlane.f32.xlu0 %v784
      %v805 = vpop.xlane.xlu0 %804
      %806 = vadd.xlane.f32.xlu0 %v785
      %v807 = vpop.xlane.xlu0 %806
      %808 = vadd.xlane.f32.xlu0 %v786
      %v809 = vpop.xlane.xlu0 %808
      %810 = vadd.xlane.f32.xlu0 %v787
      %v811 = vpop.xlane.xlu0 %810
      %812 = vadd.xlane.f32.xlu0 %v788
      %v813 = vpop.xlane.xlu0 %812
      %814 = vadd.xlane.f32.xlu0 %v789
      %v815 = vpop.xlane.xlu0 %814
      %816 = vadd.xlane.f32.xlu0 %v790
      %v817 = vpop.xlane.xlu0 %816
      %818 = vadd.xlane.f32.xlu0 %v791
      %v819 = vpop.xlane.xlu0 %818
      %820 = vadd.xlane.f32.xlu0 %v792
      %v821 = vpop.xlane.xlu0 %820
      %822 = vadd.xlane.f32.xlu0 %v793
      %v823 = vpop.xlane.xlu0 %822
      %824 = vadd.xlane.f32.xlu0 %v794
      %v825 = vpop.xlane.xlu0 %824
      %826 = vadd.xlane.f32.xlu0 %v795
      %v827 = vpop.xlane.xlu0 %826
      %v828 = vld [vmem:[#allocation2] sm:$0x1]
      %v830 = vlaneseq
      %v831 = vshrl.u32 %v830, 7
      %v832 = vsub.s32 0, %v831
      %v833 = vrot.slane %v828, %v832
      %v835 = vadd.f32 %v797, %v833
      %v836 = vadd.f32 %v799, %v833
      %v837 = vadd.f32 %v801, %v833
      %v838 = vadd.f32 %v803, %v833
      %v839 = vadd.f32 %v805, %v833
      %v840 = vadd.f32 %v807, %v833
      %v841 = vadd.f32 %v809, %v833
      %v842 = vadd.f32 %v811, %v833
      %v843 = vadd.f32 %v813, %v833
      %v844 = vadd.f32 %v815, %v833
      %v845 = vadd.f32 %v817, %v833
      %v846 = vadd.f32 %v819, %v833
      %v847 = vadd.f32 %v821, %v833
      %v848 = vadd.f32 %v823, %v833
      %v849 = vadd.f32 %v825, %v833
      %v850 = vadd.f32 %v827, %v833
      %v851 = vxor.u32 %v835, 2147483648
      %v852 = vxor.u32 %v836, 2147483648
      %v853 = vxor.u32 %v837, 2147483648
      %v854 = vxor.u32 %v838, 2147483648
      %v855 = vxor.u32 %v839, 2147483648
      %v856 = vxor.u32 %v840, 2147483648
      %v857 = vxor.u32 %v841, 2147483648
      %v858 = vxor.u32 %v842, 2147483648
      %v859 = vxor.u32 %v843, 2147483648
      %v860 = vxor.u32 %v844, 2147483648
      %v861 = vxor.u32 %v845, 2147483648
      %v862 = vxor.u32 %v846, 2147483648
      %v863 = vxor.u32 %v847, 2147483648
      %v864 = vxor.u32 %v848, 2147483648
      %v865 = vxor.u32 %v849, 2147483648
      %v866 = vxor.u32 %v850, 2147483648
      %v867 = vmul.f32 %v851, 1.442695
      %v868 = vpow.pop %v867
      %v869 = vmul.f32 %v852, 1.442695
      %v870 = vpow.pop %v869
      %v871 = vmul.f32 %v853, 1.442695
      %v872 = vpow.pop %v871
      %v873 = vmul.f32 %v854, 1.442695
      %v874 = vpow.pop %v873
      %v875 = vmul.f32 %v855, 1.442695
      %v876 = vpow.pop %v875
      %v877 = vmul.f32 %v856, 1.442695
      %v878 = vpow.pop %v877
      %v879 = vmul.f32 %v857, 1.442695
      %v880 = vpow.pop %v879
      %v881 = vmul.f32 %v858, 1.442695
      %v882 = vpow.pop %v881
      %v883 = vmul.f32 %v859, 1.442695
      %v884 = vpow.pop %v883
      %v885 = vmul.f32 %v860, 1.442695
      %v886 = vpow.pop %v885
      %v887 = vmul.f32 %v861, 1.442695
      %v888 = vpow.pop %v887
      %v889 = vmul.f32 %v862, 1.442695
      %v890 = vpow.pop %v889
      %v891 = vmul.f32 %v863, 1.442695
      %v892 = vpow.pop %v891
      %v893 = vmul.f32 %v864, 1.442695
      %v894 = vpow.pop %v893
      %v895 = vmul.f32 %v865, 1.442695
      %v896 = vpow.pop %v895
      %v897 = vmul.f32 %v866, 1.442695
      %v898 = vpow.pop %v897
      %v899 = vadd.f32 %v868, 1.0
      %v900 = vadd.f32 %v870, 1.0
      %v901 = vadd.f32 %v872, 1.0
      %v902 = vadd.f32 %v874, 1.0
      %v903 = vadd.f32 %v876, 1.0
      %v904 = vadd.f32 %v878, 1.0
      %v905 = vadd.f32 %v880, 1.0
      %v906 = vadd.f32 %v882, 1.0
      %v907 = vadd.f32 %v884, 1.0
      %v908 = vadd.f32 %v886, 1.0
      %v909 = vadd.f32 %v888, 1.0
      %v910 = vadd.f32 %v890, 1.0
      %v911 = vadd.f32 %v892, 1.0
      %v912 = vadd.f32 %v894, 1.0
      %v913 = vadd.f32 %v896, 1.0
      %v914 = vadd.f32 %v898, 1.0
      %v915 = vrcp.pop %v899
      %v916 = vmul.f32 1.0, %v915
      %v917 = vrcp.pop %v900
      %v918 = vmul.f32 1.0, %v917
      %v919 = vrcp.pop %v901
      %v920 = vmul.f32 1.0, %v919
      %v921 = vrcp.pop %v902
      %v922 = vmul.f32 1.0, %v921
      %v923 = vrcp.pop %v903
      %v924 = vmul.f32 1.0, %v923
      %v925 = vrcp.pop %v904
      %v926 = vmul.f32 1.0, %v925
      %v927 = vrcp.pop %v905
      %v928 = vmul.f32 1.0, %v927
      %v929 = vrcp.pop %v906
      %v930 = vmul.f32 1.0, %v929
      %v931 = vrcp.pop %v907
      %v932 = vmul.f32 1.0, %v931
      %v933 = vrcp.pop %v908
      %v934 = vmul.f32 1.0, %v933
      %v935 = vrcp.pop %v909
      %v936 = vmul.f32 1.0, %v935
      %v937 = vrcp.pop %v910
      %v938 = vmul.f32 1.0, %v937
      %v939 = vrcp.pop %v911
      %v940 = vmul.f32 1.0, %v939
      %v941 = vrcp.pop %v912
      %v942 = vmul.f32 1.0, %v941
      %v943 = vrcp.pop %v913
      %v944 = vmul.f32 1.0, %v943
      %v945 = vrcp.pop %v914
      %v946 = vmul.f32 1.0, %v945
      %948 = vset.pattern.permute.xlu0 0
      %949 = vperm.xlu0 %948, %v916
      %v950 = vpop.permute.xlu0 %949
      %953 = vset.pattern.permute.xlu0 0
      %954 = vperm.xlu0 %953, %v918
      %v955 = vpop.permute.xlu0 %954
      %958 = vset.pattern.permute.xlu0 0
      %959 = vperm.xlu0 %958, %v920
      %v960 = vpop.permute.xlu0 %959
      %963 = vset.pattern.permute.xlu0 0
      %964 = vperm.xlu0 %963, %v922
      %v965 = vpop.permute.xlu0 %964
      %968 = vset.pattern.permute.xlu0 0
      %969 = vperm.xlu0 %968, %v924
      %v970 = vpop.permute.xlu0 %969
      %973 = vset.pattern.permute.xlu0 0
      %974 = vperm.xlu0 %973, %v926
      %v975 = vpop.permute.xlu0 %974
      %978 = vset.pattern.permute.xlu0 0
      %979 = vperm.xlu0 %978, %v928
      %v980 = vpop.permute.xlu0 %979
      %983 = vset.pattern.permute.xlu0 0
      %984 = vperm.xlu0 %983, %v930
      %v985 = vpop.permute.xlu0 %984
      %988 = vset.pattern.permute.xlu0 0
      %989 = vperm.xlu0 %988, %v932
      %v990 = vpop.permute.xlu0 %989
      %993 = vset.pattern.permute.xlu0 0
      %994 = vperm.xlu0 %993, %v934
      %v995 = vpop.permute.xlu0 %994
      %998 = vset.pattern.permute.xlu0 0
      %999 = vperm.xlu0 %998, %v936
      %v1000 = vpop.permute.xlu0 %999
      %1003 = vset.pattern.permute.xlu0 0
      %1004 = vperm.xlu0 %1003, %v938
      %v1005 = vpop.permute.xlu0 %1004
      %1008 = vset.pattern.permute.xlu0 0
      %1009 = vperm.xlu0 %1008, %v940
      %v1010 = vpop.permute.xlu0 %1009
      %1013 = vset.pattern.permute.xlu0 0
      %1014 = vperm.xlu0 %1013, %v942
      %v1015 = vpop.permute.xlu0 %1014
      %1018 = vset.pattern.permute.xlu0 0
      %1019 = vperm.xlu0 %1018, %v944
      %v1020 = vpop.permute.xlu0 %1019
      %1023 = vset.pattern.permute.xlu0 0
      %1024 = vperm.xlu0 %1023, %v946
      %v1025 = vpop.permute.xlu0 %1024
      %v1027 = vmul.f32 %v306, %v950
      %v1028 = vmul.f32 %v307, %v955
      %v1029 = vmul.f32 %v308, %v960
      %v1030 = vmul.f32 %v309, %v965
      %v1031 = vmul.f32 %v310, %v970
      %v1032 = vmul.f32 %v311, %v975
      %v1033 = vmul.f32 %v312, %v980
      %v1034 = vmul.f32 %v313, %v985
      %v1035 = vmul.f32 %v314, %v990
      %v1036 = vmul.f32 %v315, %v995
      %v1037 = vmul.f32 %v316, %v1000
      %v1038 = vmul.f32 %v317, %v1005
      %v1039 = vmul.f32 %v318, %v1010
      %v1040 = vmul.f32 %v319, %v1015
      %v1041 = vmul.f32 %v320, %v1020
      %v1042 = vmul.f32 %v321, %v1025
      %1043 = vst.msk [vmem:[%s304] sm:$0xff] %vm340, %v1027
      %1044 = vst.msk [vmem:[%s304 + $0x8] sm:$0xff] %vm340, %v1028
      %1045 = vst.msk [vmem:[%s304 + $0x10] sm:$0xff] %vm340, %v1029
      %1046 = vst.msk [vmem:[%s304 + $0x18] sm:$0xff] %vm340, %v1030
      %1047 = vst.msk [vmem:[%s304 + $0x20] sm:$0xff] %vm340, %v1031
      %1048 = vst.msk [vmem:[%s304 + $0x28] sm:$0xff] %vm340, %v1032
      %1049 = vst.msk [vmem:[%s304 + $0x30] sm:$0xff] %vm340, %v1033
      %1050 = vst.msk [vmem:[%s304 + $0x38] sm:$0xff] %vm340, %v1034
      %1051 = vst.msk [vmem:[%s304 + $0x40] sm:$0xff] %vm340, %v1035
      %1052 = vst.msk [vmem:[%s304 + $0x48] sm:$0xff] %vm340, %v1036
      %1053 = vst.msk [vmem:[%s304 + $0x50] sm:$0xff] %vm340, %v1037
      %1054 = vst.msk [vmem:[%s304 + $0x58] sm:$0xff] %vm340, %v1038
      %1055 = vst.msk [vmem:[%s304 + $0x60] sm:$0xff] %vm340, %v1039
      %1056 = vst.msk [vmem:[%s304 + $0x68] sm:$0xff] %vm340, %v1040
      %1057 = vst.msk [vmem:[%s304 + $0x70] sm:$0xff] %vm340, %v1041
      %1058 = vst.msk [vmem:[%s304 + $0x78] sm:$0xff] %vm340, %v1042
      %s1059 = smul.u32 16, %s20
      %p1060 = scmp.lt.s32.totalorder %s1059, 63
      %s1061 = scalar_select %p1060, %s1059, 63
      %s1062 = smul.addr %s1061, 8
      %s1063 = scalar_lea.vmem %s7, %s1062
      // Predicated region
      $region49: #{tpu_custom_call.1} parent=47 // pred_check
        %p1064 = pneg %p195
      $region50: #{tpu_custom_call.1} parent=47 // pred_check_branch
        %1066 = sbr.rel (%p1064) target = $region52
      $region51: #{tpu_custom_call.1} parent=47 // pred_region
        %s1067 = smul.u32 16, %s20
      $region52: #{tpu_custom_call.1} parent=47 // pred_fallthru
        _
    $region48: #{tpu_custom_call.1} parent=5 // pred_fallthru
      _
    %p1068 = scmp.le.s32.totalorder 2, %s15
    // Predicated region
    $region53: #{tpu_custom_call.1} parent=5 // pred_check
      %p1069 = pneg %p1068
    $region54: #{tpu_custom_call.1} parent=5 // pred_check_branch
      %1071 = sbr.rel (%p1069) target = $region56
    $region55: #{tpu_custom_call.1} parent=5 // pred_region
      %s1072 = ssub.s32 %s15, 2
      // Predicated region
      $region57: #{tpu_custom_call.1} parent=55 // pred_check
        %p1073 = pneg %p201
      $region58: #{tpu_custom_call.1} parent=55 // pred_check_branch
        %1075 = sbr.rel (%p1073) target = $region60
      $region59: #{tpu_custom_call.1} parent=55 // pred_region
        %s1076 = smul.u32 16, %s21
        %p1077 = scmp.lt.s32.totalorder %s1076, 63
        %s1078 = scalar_select %p1077, %s1076, 63
        %s1079 = smul.addr %s1078, 8
        %s1080 = scalar_lea.vmem %s7, %s1079
      $region60: #{tpu_custom_call.1} parent=55 // pred_fallthru
        _
    $region56: #{tpu_custom_call.1} parent=5 // pred_fallthru
      _
  $region6: #{tpu_custom_call.1} parent=0 // loop_footer
    %s19 = sadd.s32 1, %s15
  $region7: #{tpu_custom_call.1} parent=0 // loop_footer_branch
    %14 = sbr.rel target = $region3
  $region8: #{tpu_custom_call.1} parent=0 // loop_exit
    _

</llo_original>
